<compile_context>
chip_gen: v6e
topology: v6e:2x2x1
jax: 0.10.0
libtpu: 0.0.40
codegen_flags: <defaults>
</compile_context>

<pallas_src>
import functools
import math

import numpy as np
import jax
import jax.numpy as jnp
from jax.experimental import pallas as pl
from jax.experimental.pallas import tpu as pltpu

HIDDEN = 32
LOSS_STD = 0.01
LOSS_EPS = 1e-16
PI = math.pi
TWO_PI = 2.0 * math.pi
INV_TWO_PI = 1.0 / TWO_PI
LANE = 128


def _wrap_angle_fast(x):
    # ((x + pi) mod 2*pi) - pi  ==  x - 2*pi*floor((x + pi) / (2*pi))
    return x - TWO_PI * jnp.floor((x + PI) * INV_TWO_PI)


def _motion_kernel(noise_ref, particles_ref, states_ref, b1e_ref, act_ref,
                   w1nT_ref, w2T_ref, b2T_ref, w3T_ref, b3T_ref, inv_sss_ref,
                   moved_ref, probs_ref, *, n_valid, bt, npad):
    coef = (1.0 / float(n_valid)) / (2.0 * PI * LOSS_STD ** 2) ** 0.5
    neg_half_inv_var = -1.0 / (2.0 * LOSS_STD ** 2)
    hidden = w2T_ref.shape[0]

    # Per-batch action / first-layer bias broadcast into their lane segments
    # (built once per grid step; bt is a small compile-time constant).
    if bt == 1:
        b1_slab = jnp.broadcast_to(b1e_ref[0], (hidden, npad))        # (H, ct)
        act_slab = jnp.broadcast_to(act_ref[0], (3, npad))            # (3, ct)
    else:
        b1_slab = jnp.concatenate(
            [jnp.broadcast_to(b1e_ref[b], (hidden, npad)) for b in range(bt)],
            axis=1)
        act_slab = jnp.concatenate(
            [jnp.broadcast_to(act_ref[b], (3, npad)) for b in range(bt)],
            axis=1)

    # --- ActionSampler MLP: one fused bf16 matmul per layer over bt*npad lanes ---
    noise = noise_ref[...]                                             # (3, ct) bf16
    h1 = jnp.maximum(
        jnp.dot(w1nT_ref[...], noise, preferred_element_type=jnp.float32)
        + b1_slab, 0.0)                                                # (H, ct) f32
    h2 = jnp.maximum(
        jnp.dot(w2T_ref[...], h1.astype(jnp.bfloat16),
                preferred_element_type=jnp.float32) + b2T_ref[...], 0.0)
    delta = jnp.dot(w3T_ref[...], h2.astype(jnp.bfloat16),
                    preferred_element_type=jnp.float32) + b3T_ref[...]  # (3, ct)
    noisy = act_slab + delta                                            # (3, ct) f32

    # --- mode == 0 analytic odometry dynamics (component-major rows x, y, theta) ---
    p = particles_ref[...]                                              # (3, ct) f32
    theta = p[2:3, :]
    st = jnp.sin(theta)
    cth = jnp.cos(theta)
    nx = noisy[0:1, :]
    ny = noisy[1:2, :]
    new_x = p[0:1, :] + nx * st + ny * cth
    new_y = p[1:2, :] - nx * cth + ny * st
    new_t = _wrap_angle_fast(theta + noisy[2:3, :])
    moved = jnp.concatenate([new_x, new_y, new_t], axis=0)              # (3, ct)
    moved_ref[...] = moved                                              # one lane-dense store

    # --- MLE-loss partial: per-lane Gaussian probs (reduced in XLA epilogue) ---
    diff = moved - states_ref[...]                                      # dense (3, ct) slab
    row = jax.lax.broadcasted_iota(jnp.int32, diff.shape, 0)
    diff = jnp.where(row == 2, _wrap_angle_fast(diff), diff)            # wrap theta row only
    d = diff * inv_sss_ref[...]                                         # (3,1) lane broadcast
    dists = jnp.sum(d * d, axis=0, keepdims=True)                       # (1, ct)
    probs = coef * jnp.exp(neg_half_inv_var * dists)                    # (1, ct)
    if n_valid < npad:
        lane_local = jax.lax.broadcasted_iota(jnp.int32, (1, npad), 1)
        seg_mask = (lane_local < n_valid).astype(jnp.float32)
        mask = jnp.tile(seg_mask, (1, bt)) if bt > 1 else seg_mask
        probs = probs * mask
    probs_ref[...] = probs


def _pick_bt(batch, npad, budget_bytes=8 << 20, bytes_per_lane=768, max_bt=64):
    """Batches per grid step, sized from a VMEM budget (double-buffered streams +
    live (H, ct) intermediates ~ bytes_per_lane per lane column)."""
    max_lanes = max(npad, budget_bytes // bytes_per_lane)
    cap = max(1, min(max_bt, max_lanes // npad))
    divisors = [d for d in range(1, batch + 1) if batch % d == 0 and d <= cap]
    if not divisors:
        return 1
    # Prefer >= 2 grid steps when possible so both v7x TensorCores get fed.
    multi = [d for d in divisors if batch // d >= 2]
    return max(multi) if multi else max(divisors)


def motion_model_forward(actions, particles, states, stds_a, means_a,
                         state_step_sizes, noise, params):
    """mode=0, train=True forward. Returns (moved_particles, mle_loss)."""
    w1, b1, w2, b2, w3, b3 = params
    B, N, _ = particles.shape
    npad = max(LANE, ((N + LANE - 1) // LANE) * LANE)
    pad = npad - N
    bt = _pick_bt(B, npad)
    ct = bt * npad
    grid = (B // bt,)

    # --- wrapper-side layout plumbing: fold batch into the lane axis ---
    def fold(x):  # (B, N, 3) -> (3, B*npad); each batch owns a contiguous Npad segment
        x = jnp.transpose(x, (2, 0, 1))
        if pad:
            x = jnp.pad(x, ((0, 0), (0, 0), (0, pad)))
        return jnp.reshape(x, (3, B * npad))

    noise_f = fold(noise).astype(jnp.bfloat16)       # MXU-only stream -> half HBM bytes
    particles_f = fold(particles)
    states_f = fold(states)

    # Fold the broadcast normalized action through W1 into a per-batch bias (f32).
    a_norm = (actions[:, 0, :] - means_a.reshape(1, 3)) / stds_a.reshape(1, 3)   # (B, 3)
    b1_eff = (b1 + a_norm @ w1[:3, :]).astype(jnp.float32)[:, :, None]           # (B, H, 1)
    actions_cm = jnp.transpose(actions, (0, 2, 1)).astype(jnp.float32)            # (B, 3, 1)

    w1nT = jnp.transpose(w1[3:, :]).astype(jnp.bfloat16)        # (H, 3)  noise rows of W1
    w2T = jnp.transpose(w2).astype(jnp.bfloat16)                # (H, H)
    b2T = jnp.reshape(b2, (HIDDEN, 1)).astype(jnp.float32)      # (H, 1)
    w3T = jnp.transpose(w3).astype(jnp.bfloat16)                # (3, H)
    b3T = jnp.reshape(b3, (3, 1)).astype(jnp.float32)           # (3, 1)
    inv_sss = jnp.reshape(1.0 / state_step_sizes, (3, 1)).astype(jnp.float32)

    lane_map = lambda i: (0, i)
    batch_map = lambda i: (i, 0, 0)
    const_map = lambda i: (0, 0)

    kernel = functools.partial(_motion_kernel, n_valid=N, bt=bt, npad=npad)
    mlp_flops = 2 * B * N * (3 * HIDDEN + HIDDEN * HIDDEN + HIDDEN * 3)
    cost = pl.CostEstimate(flops=mlp_flops + 40 * B * N,
                           transcendentals=3 * B * N,
                           bytes_accessed=B * npad * 46 + 4 * HIDDEN * HIDDEN)

    moved_f, probs_f = pl.pallas_call(
        kernel,
        out_shape=(jax.ShapeDtypeStruct((3, B * npad), jnp.float32),
                   jax.ShapeDtypeStruct((1, B * npad), jnp.float32)),
        grid_spec=pltpu.PrefetchScalarGridSpec(
            num_scalar_prefetch=0,
            grid=grid,
            in_specs=[
                pl.BlockSpec((3, ct), lane_map),              # noise (bf16, lane-folded)
                pl.BlockSpec((3, ct), lane_map),              # particles
                pl.BlockSpec((3, ct), lane_map),              # states
                pl.BlockSpec((bt, HIDDEN, 1), batch_map),     # per-batch b1_eff
                pl.BlockSpec((bt, 3, 1), batch_map),          # per-batch actions
                pl.BlockSpec((HIDDEN, 3), const_map),         # W1 (noise rows)^T
                pl.BlockSpec((HIDDEN, HIDDEN), const_map),    # W2^T
                pl.BlockSpec((HIDDEN, 1), const_map),         # b2^T
                pl.BlockSpec((3, HIDDEN), const_map),         # W3^T
                pl.BlockSpec((3, 1), const_map),              # b3^T
                pl.BlockSpec((3, 1), const_map),              # 1 / state_step_sizes
            ],
            out_specs=[
                pl.BlockSpec((3, ct), lane_map),              # moved (lane-dense)
                pl.BlockSpec((1, ct), lane_map),              # per-lane dist_probs
            ],
        ),
        compiler_params=pltpu.CompilerParams(
            dimension_semantics=("parallel",),
            vmem_limit_bytes=32 * 1024 * 1024),
        cost_estimate=cost,
    )(noise_f, particles_f, states_f, b1_eff, actions_cm,
      w1nT, w2T, b2T, w3T, b3T, inv_sss)

    # Layout plumbing back to (B, N, 3); finish the MLE loss in the XLA epilogue.
    moved = jnp.transpose(jnp.reshape(moved_f, (3, B, npad)), (1, 2, 0))[:, :N, :]
    probsum = jnp.sum(jnp.reshape(probs_f, (B, npad)), axis=1)
    mle_loss = jnp.mean(-jnp.log(LOSS_EPS + probsum))
    return moved, mle_loss


def _reference_forward(actions, particles, states, stds_a, means_a,
                       state_step_sizes, noise, params):
    """Pure-JAX f32 reference of the same semantics (for validation)."""
    w1, b1, w2, b2, w3, b3 = params
    B, N, _ = particles.shape
    a_norm = (actions - means_a.reshape(1, 1, 3)) / stds_a.reshape(1, 1, 3)
    x = jnp.concatenate([jnp.broadcast_to(a_norm, (B, N, 3)), noise], axis=-1)
    h1 = jnp.maximum(x @ w1 + b1, 0.0)
    h2 = jnp.maximum(h1 @ w2 + b2, 0.0)
    noisy = actions + (h2 @ w3 + b3)
    theta = particles[:, :, 2:3]
    st, ctt = jnp.sin(theta), jnp.cos(theta)
    new_x = particles[:, :, 0:1] + noisy[:, :, 0:1] * st + noisy[:, :, 1:2] * ctt
    new_y = particles[:, :, 1:2] + (-noisy[:, :, 0:1] * ctt + noisy[:, :, 1:2] * st)
    new_t = _wrap_angle_fast(particles[:, :, 2:3] + noisy[:, :, 2:3])
    moved = jnp.concatenate([new_x, new_y, new_t], axis=-1)
    sss = state_step_sizes.reshape(1, 1, 3)
    diff = moved - states
    d = jnp.stack([diff[:, :, 0] / sss[:, :, 0],
                   diff[:, :, 1] / sss[:, :, 1],
                   _wrap_angle_fast(diff[:, :, 2]) / sss[:, :, 2]], axis=-1)
    dists = jnp.sum(d * d, axis=-1)
    probs = (1.0 / N) / (2 * PI * LOSS_STD ** 2) ** 0.5 * jnp.exp(-dists / (2 * LOSS_STD ** 2))
    loss = jnp.mean(-jnp.log(LOSS_EPS + jnp.sum(probs, axis=-1)))
    return moved, loss


if __name__ == "__main__":
    B, N = 2, 64
    key = jax.random.PRNGKey(0)
    ks = jax.random.split(key, 13)

    actions = jax.random.normal(ks[0], (B, 1, 3), jnp.float32)
    particles = jax.random.normal(ks[1], (B, N, 3), jnp.float32)
    states = jax.random.normal(ks[2], (B, N, 3), jnp.float32)
    stds_a = jnp.abs(jax.random.normal(ks[3], (3,), jnp.float32)) + 0.5
    means_a = 0.1 * jax.random.normal(ks[4], (3,), jnp.float32)
    state_step_sizes = jnp.abs(jax.random.normal(ks[5], (3,), jnp.float32)) + 0.5
    noise = jax.random.normal(ks[6], (B, N, 3), jnp.float32)   # ActionSampler's random input

    # Deterministic synthetic ActionSampler MLP parameters (6 -> 32 -> 32 -> 3).
    w1 = 0.1 * jax.random.normal(ks[7], (6, HIDDEN), jnp.float32)
    b1 = jnp.zeros((1, HIDDEN), jnp.float32)
    w2 = 0.1 * jax.random.normal(ks[8], (HIDDEN, HIDDEN), jnp.float32)
    b2 = jnp.zeros((1, HIDDEN), jnp.float32)
    w3 = 0.1 * jax.random.normal(ks[9], (HIDDEN, 3), jnp.float32)
    b3 = jnp.zeros((1, 3), jnp.float32)
    params = (w1, b1, w2, b2, w3, b3)

    moved, loss = motion_model_forward(actions, particles, states, stds_a,
                                       means_a, state_step_sizes, noise, params)
    jax.block_until_ready((moved, loss))

    ref_moved, ref_loss = _reference_forward(actions, particles, states, stds_a,
                                             means_a, state_step_sizes, noise, params)
    moved_np, ref_np = np.asarray(moved), np.asarray(ref_moved)
    # x / y: 2e-2 tolerance accounts for bf16 MXU operands (f32 accumulation).
    np.testing.assert_allclose(moved_np[:, :, :2], ref_np[:, :, :2],
                               rtol=2e-2, atol=2e-2)
    # theta: compare modulo 2*pi (wrap boundary may flip under bf16 perturbation).
    dth = moved_np[:, :, 2] - ref_np[:, :, 2]
    dth = dth - TWO_PI * np.floor((dth + PI) * INV_TWO_PI)
    assert np.max(np.abs(dth)) < 2e-2, float(np.max(np.abs(dth)))
    np.testing.assert_allclose(np.asarray(loss), np.asarray(ref_loss),
                               rtol=1e-3, atol=1e-3)

    print("KERNEL_OK")
</pallas_src>

<mosaic_0001>
module attributes {stable_mosaic.version = 11 : i64} {
  func.func @_motion_kernel(%arg0: i32, %arg1: memref<3x128xbf16, #tpu.memory_space<vmem>>, %arg2: memref<3x128xf32, #tpu.memory_space<vmem>>, %arg3: memref<3x128xf32, #tpu.memory_space<vmem>>, %arg4: memref<1x32x1xf32, #tpu.memory_space<vmem>>, %arg5: memref<1x3x1xf32, #tpu.memory_space<vmem>>, %arg6: memref<32x3xbf16, #tpu.memory_space<vmem>>, %arg7: memref<32x32xbf16, #tpu.memory_space<vmem>>, %arg8: memref<32x1xf32, #tpu.memory_space<vmem>>, %arg9: memref<3x32xbf16, #tpu.memory_space<vmem>>, %arg10: memref<3x1xf32, #tpu.memory_space<vmem>>, %arg11: memref<3x1xf32, #tpu.memory_space<vmem>>, %arg12: memref<3x128xf32, #tpu.memory_space<vmem>>, %arg13: memref<1x128xf32, #tpu.memory_space<vmem>>) attributes {dimension_semantics = [#tpu.dimension_semantics<parallel>], iteration_bounds = array<i64: 2>, scalar_prefetch = 0 : i64, scratch_operands = 0 : i64, tpu.core_type = #tpu.core_type<tc>, window_params = [{transform_indices = @transform_0, window_bounds = array<i64: 3, 128>}, {transform_indices = @transform_1, window_bounds = array<i64: 3, 128>}, {transform_indices = @transform_2, window_bounds = array<i64: 3, 128>}, {transform_indices = @transform_3, window_bounds = array<i64: 1, 32, 1>}, {transform_indices = @transform_4, window_bounds = array<i64: 1, 3, 1>}, {pipeline_mode = #tpu.pipeline_mode<synchronous>, transform_indices = @transform_5, window_bounds = array<i64: 32, 3>}, {pipeline_mode = #tpu.pipeline_mode<synchronous>, transform_indices = @transform_6, window_bounds = array<i64: 32, 32>}, {pipeline_mode = #tpu.pipeline_mode<synchronous>, transform_indices = @transform_7, window_bounds = array<i64: 32, 1>}, {pipeline_mode = #tpu.pipeline_mode<synchronous>, transform_indices = @transform_8, window_bounds = array<i64: 3, 32>}, {pipeline_mode = #tpu.pipeline_mode<synchronous>, transform_indices = @transform_9, window_bounds = array<i64: 3, 1>}, {pipeline_mode = #tpu.pipeline_mode<synchronous>, transform_indices = @transform_10, window_bounds = array<i64: 3, 1>}, {transform_indices = @transform_11, window_bounds = array<i64: 3, 128>}, {transform_indices = @transform_12, window_bounds = array<i64: 1, 128>}]} {
    %c0 = arith.constant 0 : index
    %c0_0 = arith.constant 0 : index
    %c0_1 = arith.constant 0 : index
    %0 = vector.load %arg4[%c0, %c0_0, %c0_1] : memref<1x32x1xf32, #tpu.memory_space<vmem>>, vector<1x32x1xf32>
    %1 = vector.shape_cast %0 : vector<1x32x1xf32> to vector<32x1xf32>
    %2 = vector.shape_cast %1 : vector<32x1xf32> to vector<32x1xf32>
    %3 = vector.broadcast %2 : vector<32x1xf32> to vector<32x128xf32>
    %c0_2 = arith.constant 0 : index
    %c0_3 = arith.constant 0 : index
    %c0_4 = arith.constant 0 : index
    %4 = vector.load %arg5[%c0_2, %c0_3, %c0_4] : memref<1x3x1xf32, #tpu.memory_space<vmem>>, vector<1x3x1xf32>
    %5 = vector.shape_cast %4 : vector<1x3x1xf32> to vector<3x1xf32>
    %6 = vector.shape_cast %5 : vector<3x1xf32> to vector<3x1xf32>
    %7 = vector.broadcast %6 : vector<3x1xf32> to vector<3x128xf32>
    %c0_5 = arith.constant 0 : index
    %c0_6 = arith.constant 0 : index
    %8 = vector.load %arg1[%c0_5, %c0_6] : memref<3x128xbf16, #tpu.memory_space<vmem>>, vector<3x128xbf16>
    %c0_7 = arith.constant 0 : index
    %c0_8 = arith.constant 0 : index
    %9 = vector.load %arg6[%c0_7, %c0_8] : memref<32x3xbf16, #tpu.memory_space<vmem>>, vector<32x3xbf16>
    %cst = arith.constant dense<0.000000e+00> : vector<32x128xf32>
    %10 = tpu.matmul %9, %8, %cst {dimension_numbers = #tpu.dot_dimension_numbers<[1], [0], [0], [1], [0, 0, 1, 1], [], []>} : vector<32x3xbf16>, vector<3x128xbf16>, vector<32x128xf32> -> vector<32x128xf32>
    %11 = arith.addf %10, %3 : vector<32x128xf32>
    %cst_9 = arith.constant 0.000000e+00 : f32
    %12 = vector.broadcast %cst_9 : f32 to vector<32x128xf32>
    %13 = arith.maximumf %11, %12 : vector<32x128xf32>
    %c0_10 = arith.constant 0 : index
    %c0_11 = arith.constant 0 : index
    %14 = vector.load %arg7[%c0_10, %c0_11] : memref<32x32xbf16, #tpu.memory_space<vmem>>, vector<32x32xbf16>
    %15 = arith.truncf %13 : vector<32x128xf32> to vector<32x128xbf16>
    %cst_12 = arith.constant dense<0.000000e+00> : vector<32x128xf32>
    %16 = tpu.matmul %14, %15, %cst_12 {dimension_numbers = #tpu.dot_dimension_numbers<[1], [0], [0], [1], [0, 0, 1, 1], [], []>} : vector<32x32xbf16>, vector<32x128xbf16>, vector<32x128xf32> -> vector<32x128xf32>
    %c0_13 = arith.constant 0 : index
    %c0_14 = arith.constant 0 : index
    %17 = vector.load %arg8[%c0_13, %c0_14] : memref<32x1xf32, #tpu.memory_space<vmem>>, vector<32x1xf32>
    %18 = vector.broadcast %17 : vector<32x1xf32> to vector<32x128xf32>
    %19 = arith.addf %16, %18 : vector<32x128xf32>
    %cst_15 = arith.constant 0.000000e+00 : f32
    %20 = vector.broadcast %cst_15 : f32 to vector<32x128xf32>
    %21 = arith.maximumf %19, %20 : vector<32x128xf32>
    %c0_16 = arith.constant 0 : index
    %c0_17 = arith.constant 0 : index
    %22 = vector.load %arg9[%c0_16, %c0_17] : memref<3x32xbf16, #tpu.memory_space<vmem>>, vector<3x32xbf16>
    %23 = arith.truncf %21 : vector<32x128xf32> to vector<32x128xbf16>
    %cst_18 = arith.constant dense<0.000000e+00> : vector<3x128xf32>
    %24 = tpu.matmul %22, %23, %cst_18 {dimension_numbers = #tpu.dot_dimension_numbers<[1], [0], [0], [1], [0, 0, 1, 1], [], []>} : vector<3x32xbf16>, vector<32x128xbf16>, vector<3x128xf32> -> vector<3x128xf32>
    %c0_19 = arith.constant 0 : index
    %c0_20 = arith.constant 0 : index
    %25 = vector.load %arg10[%c0_19, %c0_20] : memref<3x1xf32, #tpu.memory_space<vmem>>, vector<3x1xf32>
    %26 = vector.broadcast %25 : vector<3x1xf32> to vector<3x128xf32>
    %27 = arith.addf %24, %26 : vector<3x128xf32>
    %28 = arith.addf %7, %27 : vector<3x128xf32>
    %c0_21 = arith.constant 0 : index
    %c0_22 = arith.constant 0 : index
    %29 = vector.load %arg2[%c0_21, %c0_22] : memref<3x128xf32, #tpu.memory_space<vmem>>, vector<3x128xf32>
    %30 = vector.extract_strided_slice %29 {offsets = [2, 0], sizes = [1, 128], strides = [1, 1]} : vector<3x128xf32> to vector<1x128xf32>
    %31 = math.sin %30 : vector<1x128xf32>
    %32 = math.cos %30 : vector<1x128xf32>
    %33 = vector.extract_strided_slice %28 {offsets = [0, 0], sizes = [1, 128], strides = [1, 1]} : vector<3x128xf32> to vector<1x128xf32>
    %34 = vector.extract_strided_slice %28 {offsets = [1, 0], sizes = [1, 128], strides = [1, 1]} : vector<3x128xf32> to vector<1x128xf32>
    %35 = vector.extract_strided_slice %29 {offsets = [0, 0], sizes = [1, 128], strides = [1, 1]} : vector<3x128xf32> to vector<1x128xf32>
    %36 = arith.mulf %33, %31 : vector<1x128xf32>
    %37 = arith.addf %35, %36 : vector<1x128xf32>
    %38 = arith.mulf %34, %32 : vector<1x128xf32>
    %39 = arith.addf %37, %38 : vector<1x128xf32>
    %40 = vector.extract_strided_slice %29 {offsets = [1, 0], sizes = [1, 128], strides = [1, 1]} : vector<3x128xf32> to vector<1x128xf32>
    %41 = arith.mulf %33, %32 : vector<1x128xf32>
    %42 = arith.subf %40, %41 : vector<1x128xf32>
    %43 = arith.mulf %34, %31 : vector<1x128xf32>
    %44 = arith.addf %42, %43 : vector<1x128xf32>
    %45 = vector.extract_strided_slice %28 {offsets = [2, 0], sizes = [1, 128], strides = [1, 1]} : vector<3x128xf32> to vector<1x128xf32>
    %46 = arith.addf %30, %45 : vector<1x128xf32>
    %cst_23 = arith.constant 3.14159274 : f32
    %47 = vector.broadcast %cst_23 : f32 to vector<1x128xf32>
    %48 = arith.addf %46, %47 : vector<1x128xf32>
    %cst_24 = arith.constant 0.159154937 : f32
    %49 = vector.broadcast %cst_24 : f32 to vector<1x128xf32>
    %50 = arith.mulf %48, %49 : vector<1x128xf32>
    %51 = math.floor %50 : vector<1x128xf32>
    %cst_25 = arith.constant 6.28318548 : f32
    %52 = vector.broadcast %cst_25 : f32 to vector<1x128xf32>
    %53 = arith.mulf %52, %51 : vector<1x128xf32>
    %54 = arith.subf %46, %53 : vector<1x128xf32>
    %55 = tpu.concatenate %39, %44, %54 in 0 : vector<1x128xf32>, vector<1x128xf32>, vector<1x128xf32> -> vector<3x128xf32>
    %c0_26 = arith.constant 0 : index
    %c0_27 = arith.constant 0 : index
    %56 = vector.load %arg12[%c0_26, %c0_27] : memref<3x128xf32, #tpu.memory_space<vmem>>, vector<3x128xf32>
    tpu.vector_store %arg12[%c0_26, %c0_27], %55 {strides = array<i32>} : memref<3x128xf32, #tpu.memory_space<vmem>>, vector<3x128xf32>,
    %c0_28 = arith.constant 0 : index
    %c0_29 = arith.constant 0 : index
    %57 = vector.load %arg3[%c0_28, %c0_29] : memref<3x128xf32, #tpu.memory_space<vmem>>, vector<3x128xf32>
    %58 = arith.subf %55, %57 : vector<3x128xf32>
    %59 = tpu.iota {dimensions = array<i32: 0>} : vector<3x128xi32>
    %c2_i32 = arith.constant 2 : i32
    %60 = vector.broadcast %c2_i32 : i32 to vector<3x128xi32>
    %61 = arith.cmpi eq, %59, %60 : vector<3x128xi32>
    %cst_30 = arith.constant 3.14159274 : f32
    %62 = vector.broadcast %cst_30 : f32 to vector<3x128xf32>
    %63 = arith.addf %58, %62 : vector<3x128xf32>
    %cst_31 = arith.constant 0.159154937 : f32
    %64 = vector.broadcast %cst_31 : f32 to vector<3x128xf32>
    %65 = arith.mulf %63, %64 : vector<3x128xf32>
    %66 = math.floor %65 : vector<3x128xf32>
    %cst_32 = arith.constant 6.28318548 : f32
    %67 = vector.broadcast %cst_32 : f32 to vector<3x128xf32>
    %68 = arith.mulf %67, %66 : vector<3x128xf32>
    %69 = arith.subf %58, %68 : vector<3x128xf32>
    %70 = arith.select %61, %69, %58 : vector<3x128xi1>, vector<3x128xf32>
    %c0_33 = arith.constant 0 : index
    %c0_34 = arith.constant 0 : index
    %71 = vector.load %arg11[%c0_33, %c0_34] : memref<3x1xf32, #tpu.memory_space<vmem>>, vector<3x1xf32>
    %72 = vector.broadcast %71 : vector<3x1xf32> to vector<3x128xf32>
    %73 = arith.mulf %70, %72 : vector<3x128xf32>
    %74 = arith.mulf %73, %73 : vector<3x128xf32>
    %cst_35 = arith.constant dense<0.000000e+00> : vector<128xf32>
    %75 = vector.multi_reduction <add>, %74, %cst_35 [0] : vector<3x128xf32> to vector<128xf32>
    %76 = vector.shape_cast %75 : vector<128xf32> to vector<1x128xf32>
    %cst_36 = arith.constant -5.000000e+03 : f32
    %77 = vector.broadcast %cst_36 : f32 to vector<1x128xf32>
    %78 = arith.mulf %77, %76 : vector<1x128xf32>
    %79 = math.exp %78 : vector<1x128xf32>
    %cst_37 = arith.constant 0.623347342 : f32
    %80 = vector.broadcast %cst_37 : f32 to vector<1x128xf32>
    %81 = arith.mulf %80, %79 : vector<1x128xf32>
    %82 = tpu.iota {dimensions = array<i32: 1>} : vector<1x128xi32>
    %c64_i32 = arith.constant 64 : i32
    %83 = vector.broadcast %c64_i32 : i32 to vector<1x128xi32>
    %84 = arith.cmpi slt, %82, %83 : vector<1x128xi32>
    %85 = arith.extui %84 : vector<1x128xi1> to vector<1x128xi32>
    %86 = arith.sitofp %85 : vector<1x128xi32> to vector<1x128xf32>
    %87 = arith.mulf %81, %86 : vector<1x128xf32>
    %c0_38 = arith.constant 0 : index
    %c0_39 = arith.constant 0 : index
    %88 = vector.load %arg13[%c0_38, %c0_39] : memref<1x128xf32, #tpu.memory_space<vmem>>, vector<1x128xf32>
    tpu.vector_store %arg13[%c0_38, %c0_39], %87 {strides = array<i32>} : memref<1x128xf32, #tpu.memory_space<vmem>>, vector<1x128xf32>,
    return
  }
  func.func @transform_0(%arg0: i32) -> (i32, i32) {
    %c0_i32 = arith.constant 0 : i32
    %c0_i32_0 = arith.constant 0 : i32
    return %c0_i32, %arg0 : i32, i32
  }
  func.func @transform_1(%arg0: i32) -> (i32, i32) {
    %c0_i32 = arith.constant 0 : i32
    %c0_i32_0 = arith.constant 0 : i32
    return %c0_i32, %arg0 : i32, i32
  }
  func.func @transform_2(%arg0: i32) -> (i32, i32) {
    %c0_i32 = arith.constant 0 : i32
    %c0_i32_0 = arith.constant 0 : i32
    return %c0_i32, %arg0 : i32, i32
  }
  func.func @transform_3(%arg0: i32) -> (i32, i32, i32) {
    %c0_i32 = arith.constant 0 : i32
    %c0_i32_0 = arith.constant 0 : i32
    %c0_i32_1 = arith.constant 0 : i32
    return %arg0, %c0_i32, %c0_i32_0 : i32, i32, i32
  }
  func.func @transform_4(%arg0: i32) -> (i32, i32, i32) {
    %c0_i32 = arith.constant 0 : i32
    %c0_i32_0 = arith.constant 0 : i32
    %c0_i32_1 = arith.constant 0 : i32
    return %arg0, %c0_i32, %c0_i32_0 : i32, i32, i32
  }
  func.func @transform_5(%arg0: i32) -> (i32, i32) {
    %c0_i32 = arith.constant 0 : i32
    %c0_i32_0 = arith.constant 0 : i32
    %c0_i32_1 = arith.constant 0 : i32
    return %c0_i32, %c0_i32_0 : i32, i32
  }
  func.func @transform_6(%arg0: i32) -> (i32, i32) {
    %c0_i32 = arith.constant 0 : i32
    %c0_i32_0 = arith.constant 0 : i32
    %c0_i32_1 = arith.constant 0 : i32
    return %c0_i32, %c0_i32_0 : i32, i32
  }
  func.func @transform_7(%arg0: i32) -> (i32, i32) {
    %c0_i32 = arith.constant 0 : i32
    %c0_i32_0 = arith.constant 0 : i32
    %c0_i32_1 = arith.constant 0 : i32
    return %c0_i32, %c0_i32_0 : i32, i32
  }
  func.func @transform_8(%arg0: i32) -> (i32, i32) {
    %c0_i32 = arith.constant 0 : i32
    %c0_i32_0 = arith.constant 0 : i32
    %c0_i32_1 = arith.constant 0 : i32
    return %c0_i32, %c0_i32_0 : i32, i32
  }
  func.func @transform_9(%arg0: i32) -> (i32, i32) {
    %c0_i32 = arith.constant 0 : i32
    %c0_i32_0 = arith.constant 0 : i32
    %c0_i32_1 = arith.constant 0 : i32
    return %c0_i32, %c0_i32_0 : i32, i32
  }
  func.func @transform_10(%arg0: i32) -> (i32, i32) {
    %c0_i32 = arith.constant 0 : i32
    %c0_i32_0 = arith.constant 0 : i32
    %c0_i32_1 = arith.constant 0 : i32
    return %c0_i32, %c0_i32_0 : i32, i32
  }
  func.func @transform_11(%arg0: i32) -> (i32, i32) {
    %c0_i32 = arith.constant 0 : i32
    %c0_i32_0 = arith.constant 0 : i32
    return %c0_i32, %arg0 : i32, i32
  }
  func.func @transform_12(%arg0: i32) -> (i32, i32) {
    %c0_i32 = arith.constant 0 : i32
    %c0_i32_0 = arith.constant 0 : i32
    return %c0_i32, %arg0 : i32, i32
  }
}

</mosaic_0001>

<llo_original>
// kernel: tpu_custom_call.1
$region0: #{tpu_custom_call.1}
  #allocation0 [shape = 'u32[]', space=smem, size = 0x4, offset = 0x4, fixed_abs, tag = 'smem constant byte address 0x4 - core index']
  #allocation1 [shape = 'u32[144,128]{1,0:T(1,128)}', space=vmem, size = 0x12000, scoped, tag = 'internal scratch']
  %s0 = inlined_call_operand.vmem [shape: bf16[3,256], index: 0, kind: input, shape index: {}]
  %s1 = inlined_call_operand.vmem [shape: f32[3,256], index: 1, kind: input, shape index: {}]
  %s2 = inlined_call_operand.vmem [shape: f32[3,256], index: 2, kind: input, shape index: {}]
  %s3 = inlined_call_operand.vmem [shape: f32[2,32,1], index: 3, kind: input, shape index: {}]
  %s4 = inlined_call_operand.vmem [shape: f32[2,3,1], index: 4, kind: input, shape index: {}]
  %s5 = inlined_call_operand.vmem [shape: bf16[32,3], index: 5, kind: input, shape index: {}]
  %s6 = inlined_call_operand.vmem [shape: bf16[32,32], index: 6, kind: input, shape index: {}]
  %s7 = inlined_call_operand.vmem [shape: f32[32,1], index: 7, kind: input, shape index: {}]
  %s8 = inlined_call_operand.vmem [shape: bf16[3,32], index: 8, kind: input, shape index: {}]
  %s9 = inlined_call_operand.vmem [shape: f32[3,1], index: 9, kind: input, shape index: {}]
  %s10 = inlined_call_operand.vmem [shape: f32[3,1], index: 10, kind: input, shape index: {}]
  %s11 = inlined_call_operand.hbm [shape: f32[3,256], index: 11, kind: output, shape index: {0}]
  %s12 = inlined_call_operand.hbm [shape: f32[1,256], index: 12, kind: output, shape index: {1}]
  %13 = xla_tuple %s11, %s12
  %s14 = sld [smem:[#allocation0]]
  $region85: #{tpu_custom_call.1} parent=0
    _
  %s16 = ssub.s32 1, %s14
  %s17 = scalar_select 0, %s16, %s14
  $region1: #{tpu_custom_call.1} parent=0
    #allocation2 [shape = 'u8[4096]{0}', space=vmem, size = 0x1000, scoped, tag = 'output window, operand 0']
    #allocation3 [shape = 's32[2]{0}', space=sflag, size = 0x8, scoped, tag = 'scoped memory for tpu_custom_call.1']
    #allocation4 [shape = 'u8[1024]{0}', space=vmem, size = 0x400, scoped, tag = 'output window, operand 1']
    #allocation5 [shape = 's32[2]{0}', space=sflag, size = 0x8, scoped, tag = 'scoped memory for tpu_custom_call.1']
    %18 = vsyncpa [#allocation3], 0
    %s19 = scalar_lea.sflag [#allocation3], 1
    %20 = vsyncpa %s19, 0
    %21 = vsyncpa [#allocation5], 0
    %s22 = scalar_lea.sflag [#allocation5], 1
    %23 = vsyncpa %s22, 0
    loop: start=0, step=1, limit=4
    $region2: #{tpu_custom_call.1} parent=1 // loop_pre_header
      _
    $region3: #{tpu_custom_call.1} parent=1 // loop_header
      %s25 = sphi 0, %s29
      %p26 = scmp.ge.s32.totalorder %s25, 4
      %s35 = sphi 0, %s37
      %s38 = sphi 0, %s35
      %s39 = sphi 0, %s38
      %s55 = sphi 0, %s39
      %s61 = sphi 0, %s63
      %s64 = sphi 0, %s61
      %s65 = sphi 0, %s64
      %s81 = sphi 0, %s65
      %s87 = sphi 0, %s89
      %s90 = sphi 0, %s87
      %s91 = sphi 0, %s90
      %s107 = sphi 0, %s91
      %s113 = sphi 0, %s115
      %s116 = sphi 0, %s113
      %s117 = sphi 0, %s116
      %s133 = sphi 0, %s117
      %s139 = sphi 0, %s141
      %s142 = sphi 0, %s139
      %s143 = sphi 0, %s142
      %s159 = sphi 0, %s143
      %s163 = sphi 0, %s163
      %s165 = sphi 0, %s163
      %s166 = sphi 0, %s165
      %s180 = sphi 0, %s166
      %s184 = sphi 0, %s184
      %s186 = sphi 0, %s184
      %s187 = sphi 0, %s186
      %s201 = sphi 0, %s187
      %s205 = sphi 0, %s205
      %s207 = sphi 0, %s205
      %s208 = sphi 0, %s207
      %s222 = sphi 0, %s208
      %s226 = sphi 0, %s226
      %s228 = sphi 0, %s226
      %s229 = sphi 0, %s228
      %s243 = sphi 0, %s229
      %s247 = sphi 0, %s247
      %s249 = sphi 0, %s247
      %s250 = sphi 0, %s249
      %s264 = sphi 0, %s250
      %s268 = sphi 0, %s268
      %s270 = sphi 0, %s268
      %s271 = sphi 0, %s270
      %s285 = sphi 0, %s271
      %s291 = sphi 0, %s293
      %s294 = sphi 0, %s291
      %s295 = sphi 0, %s294
      %s311 = sphi 0, %s295
      %s317 = sphi 0, %s319
      %s320 = sphi 0, %s317
      %s321 = sphi 0, %s320
      %s337 = sphi 0, %s321
    $region4: #{tpu_custom_call.1} parent=1 // loop_header_branch
      %28 = sbr.rel (%p26) target = $region8
    $region5: #{tpu_custom_call.1} parent=1 // loop_body
      %s30 = ssub.s32 %s25, 1
      %s31 = ssub.s32 %s25, 2
      %s32 = sadd.s32 %s25, 1
      %s33 = ssub.s32 %s25, %s32
      %p34 = scmp.eq.s32.totalorder %s33, 0
      %s36 = sadd.s32 %s35, 1
      %s37 = scalar_select %p34, %s35, %s36
      %p40 = pneg %p34
      %p41 = scmp.eq.s32.totalorder %s25, 1
      %p42 = por %p40, %p41
      %p43 = scmp.ne.s32.totalorder %s35, %s38
      %p44 = scmp.eq.s32.totalorder %s25, 0
      %p45 = por %p43, %p44
      %p46 = scmp.ne.s32.totalorder %s35, %s38
      %p47 = scmp.eq.s32.totalorder %s30, 1
      %p48 = por %p46, %p47
      %p49 = scmp.ne.s32.totalorder %s38, %s39
      %p50 = scmp.eq.s32.totalorder %s30, 0
      %p51 = por %p49, %p50
      %p52 = scmp.ne.s32.totalorder %s38, %s39
      %p53 = scmp.eq.s32.totalorder %s31, 1
      %p54 = por %p52, %p53
      %p56 = scmp.ne.s32.totalorder %s39, %s55
      %p57 = scmp.eq.s32.totalorder %s31, 0
      %p58 = por %p56, %p57
      %s59 = ssub.s32 %s25, %s32
      %p60 = scmp.eq.s32.totalorder %s59, 0
      %s62 = sadd.s32 %s61, 1
      %s63 = scalar_select %p60, %s61, %s62
      %p66 = pneg %p60
      %p67 = scmp.eq.s32.totalorder %s25, 1
      %p68 = por %p66, %p67
      %p69 = scmp.ne.s32.totalorder %s61, %s64
      %p70 = scmp.eq.s32.totalorder %s25, 0
      %p71 = por %p69, %p70
      %p72 = scmp.ne.s32.totalorder %s61, %s64
      %p73 = scmp.eq.s32.totalorder %s30, 1
      %p74 = por %p72, %p73
      %p75 = scmp.ne.s32.totalorder %s64, %s65
      %p76 = scmp.eq.s32.totalorder %s30, 0
      %p77 = por %p75, %p76
      %p78 = scmp.ne.s32.totalorder %s64, %s65
      %p79 = scmp.eq.s32.totalorder %s31, 1
      %p80 = por %p78, %p79
      %p82 = scmp.ne.s32.totalorder %s65, %s81
      %p83 = scmp.eq.s32.totalorder %s31, 0
      %p84 = por %p82, %p83
      %s85 = ssub.s32 %s25, %s32
      %p86 = scmp.eq.s32.totalorder %s85, 0
      %s88 = sadd.s32 %s87, 1
      %s89 = scalar_select %p86, %s87, %s88
      %p92 = pneg %p86
      %p93 = scmp.eq.s32.totalorder %s25, 1
      %p94 = por %p92, %p93
      %p95 = scmp.ne.s32.totalorder %s87, %s90
      %p96 = scmp.eq.s32.totalorder %s25, 0
      %p97 = por %p95, %p96
      %p98 = scmp.ne.s32.totalorder %s87, %s90
      %p99 = scmp.eq.s32.totalorder %s30, 1
      %p100 = por %p98, %p99
      %p101 = scmp.ne.s32.totalorder %s90, %s91
      %p102 = scmp.eq.s32.totalorder %s30, 0
      %p103 = por %p101, %p102
      %p104 = scmp.ne.s32.totalorder %s90, %s91
      %p105 = scmp.eq.s32.totalorder %s31, 1
      %p106 = por %p104, %p105
      %p108 = scmp.ne.s32.totalorder %s91, %s107
      %p109 = scmp.eq.s32.totalorder %s31, 0
      %p110 = por %p108, %p109
      %s111 = ssub.s32 %s25, %s32
      %p112 = scmp.eq.s32.totalorder %s111, 0
      %s114 = sadd.s32 %s113, 1
      %s115 = scalar_select %p112, %s113, %s114
      %p118 = pneg %p112
      %p119 = scmp.eq.s32.totalorder %s25, 1
      %p120 = por %p118, %p119
      %p121 = scmp.ne.s32.totalorder %s113, %s116
      %p122 = scmp.eq.s32.totalorder %s25, 0
      %p123 = por %p121, %p122
      %p124 = scmp.ne.s32.totalorder %s113, %s116
      %p125 = scmp.eq.s32.totalorder %s30, 1
      %p126 = por %p124, %p125
      %p127 = scmp.ne.s32.totalorder %s116, %s117
      %p128 = scmp.eq.s32.totalorder %s30, 0
      %p129 = por %p127, %p128
      %p130 = scmp.ne.s32.totalorder %s116, %s117
      %p131 = scmp.eq.s32.totalorder %s31, 1
      %p132 = por %p130, %p131
      %p134 = scmp.ne.s32.totalorder %s117, %s133
      %p135 = scmp.eq.s32.totalorder %s31, 0
      %p136 = por %p134, %p135
      %s137 = ssub.s32 %s25, %s32
      %p138 = scmp.eq.s32.totalorder %s137, 0
      %s140 = sadd.s32 %s139, 1
      %s141 = scalar_select %p138, %s139, %s140
      %p144 = pneg %p138
      %p145 = scmp.eq.s32.totalorder %s25, 1
      %p146 = por %p144, %p145
      %p147 = scmp.ne.s32.totalorder %s139, %s142
      %p148 = scmp.eq.s32.totalorder %s25, 0
      %p149 = por %p147, %p148
      %p150 = scmp.ne.s32.totalorder %s139, %s142
      %p151 = scmp.eq.s32.totalorder %s30, 1
      %p152 = por %p150, %p151
      %p153 = scmp.ne.s32.totalorder %s142, %s143
      %p154 = scmp.eq.s32.totalorder %s30, 0
      %p155 = por %p153, %p154
      %p156 = scmp.ne.s32.totalorder %s142, %s143
      %p157 = scmp.eq.s32.totalorder %s31, 1
      %p158 = por %p156, %p157
      %p160 = scmp.ne.s32.totalorder %s143, %s159
      %p161 = scmp.eq.s32.totalorder %s31, 0
      %p162 = por %p160, %p161
      %s164 = sadd.s32 %s163, 1
      %p167 = scmp.eq.s32.totalorder %s25, 1
      %p168 = scmp.ne.s32.totalorder %s163, %s165
      %p169 = scmp.eq.s32.totalorder %s25, 0
      %p170 = por %p168, %p169
      %p171 = scmp.ne.s32.totalorder %s163, %s165
      %p172 = scmp.eq.s32.totalorder %s30, 1
      %p173 = por %p171, %p172
      %p174 = scmp.ne.s32.totalorder %s165, %s166
      %p175 = scmp.eq.s32.totalorder %s30, 0
      %p176 = por %p174, %p175
      %p177 = scmp.ne.s32.totalorder %s165, %s166
      %p178 = scmp.eq.s32.totalorder %s31, 1
      %p179 = por %p177, %p178
      %p181 = scmp.ne.s32.totalorder %s166, %s180
      %p182 = scmp.eq.s32.totalorder %s31, 0
      %p183 = por %p181, %p182
      %s185 = sadd.s32 %s184, 1
      %p188 = scmp.eq.s32.totalorder %s25, 1
      %p189 = scmp.ne.s32.totalorder %s184, %s186
      %p190 = scmp.eq.s32.totalorder %s25, 0
      %p191 = por %p189, %p190
      %p192 = scmp.ne.s32.totalorder %s184, %s186
      %p193 = scmp.eq.s32.totalorder %s30, 1
      %p194 = por %p192, %p193
      %p195 = scmp.ne.s32.totalorder %s186, %s187
      %p196 = scmp.eq.s32.totalorder %s30, 0
      %p197 = por %p195, %p196
      %p198 = scmp.ne.s32.totalorder %s186, %s187
      %p199 = scmp.eq.s32.totalorder %s31, 1
      %p200 = por %p198, %p199
      %p202 = scmp.ne.s32.totalorder %s187, %s201
      %p203 = scmp.eq.s32.totalorder %s31, 0
      %p204 = por %p202, %p203
      %s206 = sadd.s32 %s205, 1
      %p209 = scmp.eq.s32.totalorder %s25, 1
      %p210 = scmp.ne.s32.totalorder %s205, %s207
      %p211 = scmp.eq.s32.totalorder %s25, 0
      %p212 = por %p210, %p211
      %p213 = scmp.ne.s32.totalorder %s205, %s207
      %p214 = scmp.eq.s32.totalorder %s30, 1
      %p215 = por %p213, %p214
      %p216 = scmp.ne.s32.totalorder %s207, %s208
      %p217 = scmp.eq.s32.totalorder %s30, 0
      %p218 = por %p216, %p217
      %p219 = scmp.ne.s32.totalorder %s207, %s208
      %p220 = scmp.eq.s32.totalorder %s31, 1
      %p221 = por %p219, %p220
      %p223 = scmp.ne.s32.totalorder %s208, %s222
      %p224 = scmp.eq.s32.totalorder %s31, 0
      %p225 = por %p223, %p224
      %s227 = sadd.s32 %s226, 1
      %p230 = scmp.eq.s32.totalorder %s25, 1
      %p231 = scmp.ne.s32.totalorder %s226, %s228
      %p232 = scmp.eq.s32.totalorder %s25, 0
      %p233 = por %p231, %p232
      %p234 = scmp.ne.s32.totalorder %s226, %s228
      %p235 = scmp.eq.s32.totalorder %s30, 1
      %p236 = por %p234, %p235
      %p237 = scmp.ne.s32.totalorder %s228, %s229
      %p238 = scmp.eq.s32.totalorder %s30, 0
      %p239 = por %p237, %p238
      %p240 = scmp.ne.s32.totalorder %s228, %s229
      %p241 = scmp.eq.s32.totalorder %s31, 1
      %p242 = por %p240, %p241
      %p244 = scmp.ne.s32.totalorder %s229, %s243
      %p245 = scmp.eq.s32.totalorder %s31, 0
      %p246 = por %p244, %p245
      %s248 = sadd.s32 %s247, 1
      %p251 = scmp.eq.s32.totalorder %s25, 1
      %p252 = scmp.ne.s32.totalorder %s247, %s249
      %p253 = scmp.eq.s32.totalorder %s25, 0
      %p254 = por %p252, %p253
      %p255 = scmp.ne.s32.totalorder %s247, %s249
      %p256 = scmp.eq.s32.totalorder %s30, 1
      %p257 = por %p255, %p256
      %p258 = scmp.ne.s32.totalorder %s249, %s250
      %p259 = scmp.eq.s32.totalorder %s30, 0
      %p260 = por %p258, %p259
      %p261 = scmp.ne.s32.totalorder %s249, %s250
      %p262 = scmp.eq.s32.totalorder %s31, 1
      %p263 = por %p261, %p262
      %p265 = scmp.ne.s32.totalorder %s250, %s264
      %p266 = scmp.eq.s32.totalorder %s31, 0
      %p267 = por %p265, %p266
      %s269 = sadd.s32 %s268, 1
      %p272 = scmp.eq.s32.totalorder %s25, 1
      %p273 = scmp.ne.s32.totalorder %s268, %s270
      %p274 = scmp.eq.s32.totalorder %s25, 0
      %p275 = por %p273, %p274
      %p276 = scmp.ne.s32.totalorder %s268, %s270
      %p277 = scmp.eq.s32.totalorder %s30, 1
      %p278 = por %p276, %p277
      %p279 = scmp.ne.s32.totalorder %s270, %s271
      %p280 = scmp.eq.s32.totalorder %s30, 0
      %p281 = por %p279, %p280
      %p282 = scmp.ne.s32.totalorder %s270, %s271
      %p283 = scmp.eq.s32.totalorder %s31, 1
      %p284 = por %p282, %p283
      %p286 = scmp.ne.s32.totalorder %s271, %s285
      %p287 = scmp.eq.s32.totalorder %s31, 0
      %p288 = por %p286, %p287
      %s289 = ssub.s32 %s25, %s32
      %p290 = scmp.eq.s32.totalorder %s289, 0
      %s292 = sadd.s32 %s291, 1
      %s293 = scalar_select %p290, %s291, %s292
      %p296 = pneg %p290
      %p297 = scmp.eq.s32.totalorder %s25, 1
      %p298 = por %p296, %p297
      %p299 = scmp.ne.s32.totalorder %s291, %s294
      %p300 = scmp.eq.s32.totalorder %s25, 0
      %p301 = por %p299, %p300
      %p302 = scmp.ne.s32.totalorder %s291, %s294
      %p303 = scmp.eq.s32.totalorder %s30, 1
      %p304 = por %p302, %p303
      %p305 = scmp.ne.s32.totalorder %s294, %s295
      %p306 = scmp.eq.s32.totalorder %s30, 0
      %p307 = por %p305, %p306
      %p308 = scmp.ne.s32.totalorder %s294, %s295
      %p309 = scmp.eq.s32.totalorder %s31, 1
      %p310 = por %p308, %p309
      %p312 = scmp.ne.s32.totalorder %s295, %s311
      %p313 = scmp.eq.s32.totalorder %s31, 0
      %p314 = por %p312, %p313
      %s315 = ssub.s32 %s25, %s32
      %p316 = scmp.eq.s32.totalorder %s315, 0
      %s318 = sadd.s32 %s317, 1
      %s319 = scalar_select %p316, %s317, %s318
      %p322 = pneg %p316
      %p323 = scmp.eq.s32.totalorder %s25, 1
      %p324 = por %p322, %p323
      %p325 = scmp.ne.s32.totalorder %s317, %s320
      %p326 = scmp.eq.s32.totalorder %s25, 0
      %p327 = por %p325, %p326
      %p328 = scmp.ne.s32.totalorder %s317, %s320
      %p329 = scmp.eq.s32.totalorder %s30, 1
      %p330 = por %p328, %p329
      %p331 = scmp.ne.s32.totalorder %s320, %s321
      %p332 = scmp.eq.s32.totalorder %s30, 0
      %p333 = por %p331, %p332
      %p334 = scmp.ne.s32.totalorder %s320, %s321
      %p335 = scmp.eq.s32.totalorder %s31, 1
      %p336 = por %p334, %p335
      %p338 = scmp.ne.s32.totalorder %s321, %s337
      %p339 = scmp.eq.s32.totalorder %s31, 0
      %p340 = por %p338, %p339
      %p341 = scmp.le.s32.totalorder 1, %s25
      %p342 = scmp.lt.s32.totalorder %s25, 3
      %p343 = pnand %p341, %p342
      %p344 = pneg %p343
      // Predicated region
      $region9: #{tpu_custom_call.1} parent=5 // pred_check
        _
      $region10: #{tpu_custom_call.1} parent=5 // pred_check_branch
        %346 = sbr.rel (%p343) target = $region12
      $region11: #{tpu_custom_call.1} parent=5 // pred_region
        %s347 = ssub.s32 %s25, 1
        // Predicated region
        $region13: #{tpu_custom_call.1} parent=11 // pred_check
          %p348 = pneg %p176
        $region14: #{tpu_custom_call.1} parent=11 // pred_check_branch
          %350 = sbr.rel (%p348) target = $region16
        $region15: #{tpu_custom_call.1} parent=11 // pred_region
          _
        $region16: #{tpu_custom_call.1} parent=11 // pred_fallthru
          _
        // Predicated region
        $region17: #{tpu_custom_call.1} parent=11 // pred_check
          %p351 = pneg %p197
        $region18: #{tpu_custom_call.1} parent=11 // pred_check_branch
          %353 = sbr.rel (%p351) target = $region20
        $region19: #{tpu_custom_call.1} parent=11 // pred_region
          _
        $region20: #{tpu_custom_call.1} parent=11 // pred_fallthru
          _
        // Predicated region
        $region21: #{tpu_custom_call.1} parent=11 // pred_check
          %p354 = pneg %p218
        $region22: #{tpu_custom_call.1} parent=11 // pred_check_branch
          %356 = sbr.rel (%p354) target = $region24
        $region23: #{tpu_custom_call.1} parent=11 // pred_region
          _
        $region24: #{tpu_custom_call.1} parent=11 // pred_fallthru
          _
        // Predicated region
        $region25: #{tpu_custom_call.1} parent=11 // pred_check
          %p357 = pneg %p239
        $region26: #{tpu_custom_call.1} parent=11 // pred_check_branch
          %359 = sbr.rel (%p357) target = $region28
        $region27: #{tpu_custom_call.1} parent=11 // pred_region
          _
        $region28: #{tpu_custom_call.1} parent=11 // pred_fallthru
          _
        // Predicated region
        $region29: #{tpu_custom_call.1} parent=11 // pred_check
          %p360 = pneg %p260
        $region30: #{tpu_custom_call.1} parent=11 // pred_check_branch
          %362 = sbr.rel (%p360) target = $region32
        $region31: #{tpu_custom_call.1} parent=11 // pred_region
          _
        $region32: #{tpu_custom_call.1} parent=11 // pred_fallthru
          _
        // Predicated region
        $region33: #{tpu_custom_call.1} parent=11 // pred_check
          %p363 = pneg %p281
        $region34: #{tpu_custom_call.1} parent=11 // pred_check_branch
          %365 = sbr.rel (%p363) target = $region36
        $region35: #{tpu_custom_call.1} parent=11 // pred_region
          _
        $region36: #{tpu_custom_call.1} parent=11 // pred_fallthru
          _
      $region12: #{tpu_custom_call.1} parent=5 // pred_fallthru
        _
      %p366 = scmp.lt.s32.totalorder %s25, 2
      // Predicated region
      $region37: #{tpu_custom_call.1} parent=5 // pred_check
        %p367 = pneg %p366
      $region38: #{tpu_custom_call.1} parent=5 // pred_check_branch
        %369 = sbr.rel (%p367) target = $region40
      $region39: #{tpu_custom_call.1} parent=5 // pred_region
        // Predicated region
        $region41: #{tpu_custom_call.1} parent=39 // pred_check
          %p370 = pneg %p45
        $region42: #{tpu_custom_call.1} parent=39 // pred_check_branch
          %372 = sbr.rel (%p370) target = $region44
        $region43: #{tpu_custom_call.1} parent=39 // pred_region
          %p373 = scmp.lt.s32.totalorder %s25, 1
          %s374 = scalar_select %p373, %s25, 1
          %s375 = smul.addr %s374, 2
          %s376 = scalar_lea.vmem %s0, %s375
        $region44: #{tpu_custom_call.1} parent=39 // pred_fallthru
          _
        // Predicated region
        $region45: #{tpu_custom_call.1} parent=39 // pred_check
          %p377 = pneg %p71
        $region46: #{tpu_custom_call.1} parent=39 // pred_check_branch
          %379 = sbr.rel (%p377) target = $region48
        $region47: #{tpu_custom_call.1} parent=39 // pred_region
          %p380 = scmp.lt.s32.totalorder %s25, 1
          %s381 = scalar_select %p380, %s25, 1
          %s382 = smul.addr %s381, 4
          %s383 = scalar_lea.vmem %s1, %s382
        $region48: #{tpu_custom_call.1} parent=39 // pred_fallthru
          _
        // Predicated region
        $region49: #{tpu_custom_call.1} parent=39 // pred_check
          %p384 = pneg %p97
        $region50: #{tpu_custom_call.1} parent=39 // pred_check_branch
          %386 = sbr.rel (%p384) target = $region52
        $region51: #{tpu_custom_call.1} parent=39 // pred_region
          %p387 = scmp.lt.s32.totalorder %s25, 1
          %s388 = scalar_select %p387, %s25, 1
          %s389 = smul.addr %s388, 4
          %s390 = scalar_lea.vmem %s2, %s389
        $region52: #{tpu_custom_call.1} parent=39 // pred_fallthru
          _
        // Predicated region
        $region53: #{tpu_custom_call.1} parent=39 // pred_check
          %p391 = pneg %p123
        $region54: #{tpu_custom_call.1} parent=39 // pred_check_branch
          %393 = sbr.rel (%p391) target = $region56
        $region55: #{tpu_custom_call.1} parent=39 // pred_region
          %p394 = scmp.lt.s32.totalorder %s25, 1
          %s395 = scalar_select %p394, %s25, 1
          %s396 = smul.addr %s395, 4
          %s397 = smul.addr %s396, 8
          %s398 = scalar_lea.vmem %s3, %s397
        $region56: #{tpu_custom_call.1} parent=39 // pred_fallthru
          _
        // Predicated region
        $region57: #{tpu_custom_call.1} parent=39 // pred_check
          %p399 = pneg %p149
        $region58: #{tpu_custom_call.1} parent=39 // pred_check_branch
          %401 = sbr.rel (%p399) target = $region60
        $region59: #{tpu_custom_call.1} parent=39 // pred_region
          %p402 = scmp.lt.s32.totalorder %s25, 1
          %s403 = scalar_select %p402, %s25, 1
          %s404 = smul.addr %s403, 4
          %s405 = scalar_lea.vmem %s4, %s404
        $region60: #{tpu_custom_call.1} parent=39 // pred_fallthru
          _
      $region40: #{tpu_custom_call.1} parent=5 // pred_fallthru
        _
      %p406 = scmp.le.s32.totalorder 1, %s25
      %p407 = scmp.lt.s32.totalorder %s25, 3
      %p408 = pnand %p406, %p407
      %p409 = pneg %p408
      // Predicated region
      $region61: #{tpu_custom_call.1} parent=5 // pred_check
        _
      $region62: #{tpu_custom_call.1} parent=5 // pred_check_branch
        %411 = sbr.rel (%p408) target = $region64
      $region63: #{tpu_custom_call.1} parent=5 // pred_region
        %s412 = ssub.s32 %s25, 1
        %p413 = scmp.lt.s32.totalorder %s30, 1
        %s414 = scalar_select %p413, %s30, 1
        %s415 = smul.addr %s414, 2
        %s416 = scalar_lea.vmem %s0, %s415
        %p417 = pneg %p51
        %p418 = pneg %p48
        %p419 = scmp.lt.s32.totalorder %s30, 1
        %s420 = scalar_select %p419, %s30, 1
        %s421 = smul.addr %s420, 4
        %s422 = scalar_lea.vmem %s1, %s421
        %p423 = pneg %p77
        %p424 = pneg %p74
        %p425 = scmp.lt.s32.totalorder %s30, 1
        %s426 = scalar_select %p425, %s30, 1
        %s427 = smul.addr %s426, 4
        %s428 = scalar_lea.vmem %s2, %s427
        %p429 = pneg %p103
        %p430 = pneg %p100
        %p431 = scmp.lt.s32.totalorder %s30, 1
        %s432 = scalar_select %p431, %s30, 1
        %s433 = smul.addr %s432, 4
        %s434 = smul.addr %s433, 8
        %s435 = scalar_lea.vmem %s3, %s434
        %p436 = pneg %p129
        %p437 = pneg %p126
        %p438 = scmp.lt.s32.totalorder %s30, 1
        %s439 = scalar_select %p438, %s30, 1
        %s440 = smul.addr %s439, 4
        %s441 = scalar_lea.vmem %s4, %s440
        %p442 = pneg %p155
        %p443 = pneg %p152
        %p444 = pneg %p176
        %p445 = pneg %p173
        %p446 = pneg %p197
        %p447 = pneg %p194
        %p448 = pneg %p218
        %p449 = pneg %p215
        %p450 = pneg %p239
        %p451 = pneg %p236
        %p452 = pneg %p260
        %p453 = pneg %p257
        %p454 = pneg %p281
        %p455 = pneg %p278
        %p456 = pneg %p307
        %p457 = pneg %p304
        %s458 = sand.u32 %s294, 1
        %s459 = scalar_lea.sflag [#allocation3], %s458
        %s460 = sand.u32 %s294, 1
        %s461 = smul.addr %s460, 4
        %s462 = scalar_lea.vmem [#allocation2], %s461
        %p463 = pneg %p333
        %p464 = pneg %p330
        %s465 = sand.u32 %s320, 1
        %s466 = scalar_lea.sflag [#allocation5], %s465
        %s467 = sand.u32 %s320, 1
        %s468 = scalar_lea.vmem [#allocation4], %s467
        %p469 = scmp.lt.s32.totalorder %s30, 1
        %s470 = scalar_select %p469, %s30, 1
        %s471 = smul.addr %s470, 2
        %s472 = scalar_lea.vmem %s0, %s471
        %p473 = scmp.lt.s32.totalorder %s30, 1
        %s474 = scalar_select %p473, %s30, 1
        %s475 = smul.addr %s474, 4
        %s476 = scalar_lea.vmem %s1, %s475
        %p477 = scmp.lt.s32.totalorder %s30, 1
        %s478 = scalar_select %p477, %s30, 1
        %s479 = smul.addr %s478, 4
        %s480 = scalar_lea.vmem %s2, %s479
        %p481 = scmp.lt.s32.totalorder %s30, 1
        %s482 = scalar_select %p481, %s30, 1
        %s483 = smul.addr %s482, 4
        %s484 = smul.addr %s483, 8
        %s485 = scalar_lea.vmem %s3, %s484
        %p486 = scmp.lt.s32.totalorder %s30, 1
        %s487 = scalar_select %p486, %s30, 1
        %s488 = smul.addr %s487, 4
        %s489 = scalar_lea.vmem %s4, %s488
        %v491 = vld [vmem:[%s485] sm:$0xff]
        %v492 = vld [vmem:[%s485 + $0x8] sm:$0xff]
        %v493 = vld [vmem:[%s485 + $0x10] sm:$0xff]
        %v494 = vld [vmem:[%s485 + $0x18] sm:$0xff]
        %496 = vset.pattern.permute.xlu0 0
        %497 = vperm.xlu0 %496, %v491
        %v498 = vpop.permute.xlu0 %497
        %501 = vset.pattern.permute.xlu0 0
        %502 = vperm.xlu0 %501, %v492
        %v503 = vpop.permute.xlu0 %502
        %506 = vset.pattern.permute.xlu0 0
        %507 = vperm.xlu0 %506, %v493
        %v508 = vpop.permute.xlu0 %507
        %511 = vset.pattern.permute.xlu0 0
        %512 = vperm.xlu0 %511, %v494
        %v513 = vpop.permute.xlu0 %512
        %v515 = vld [vmem:[%s489] sm:$0x7]
        %517 = vset.pattern.permute.xlu0 0
        %518 = vperm.xlu0 %517, %v515
        %v519 = vpop.permute.xlu0 %518
        %v521 = vld [vmem:[%s472] sm:$0x3]
        %v522 = vld [vmem:[%s5] sm:$0xf]
        %v523 = vld [vmem:[%s5 + $0x4] sm:$0xf]
        %v524 = vld [vmem:[%s5 + $0x8] sm:$0xf]
        %v525 = vld [vmem:[%s5 + $0xc] sm:$0xf]
        %v530 = vunpack.c.l.b16 %v522
        %v531 = vunpack.c.l.b16 %v523
        %v532 = vunpack.c.l.b16 %v524
        %v533 = vunpack.c.l.b16 %v525
        %v534 = vpack.c.b16 %v531, %v530
        %v535 = vpack.c.b16 %v533, %v532
        %vm536 = vcmask 23552
        %v538 = vsel %vm536, %v534, 0
        %v541 = vsel %vm536, %v535, 0
        %vm543 = vcmask 1040384
        %vm544 = vcmask 1041408
        %v545 = vsel %vm543, 4294967295, 65535
        %v546 = vsel %vm544, %v545, 0
        %v548 = vand.u32 %v521, %v546
        %550 = vmatprep.subr.bf16.mxu0 0
        %551 = vmatpush1.bf16.msra.mxu0 0
        %552 = vmatprep.subr.bf16.mxu0 0
        %553 = vmatpush1.bf16.msra.mxu0 0
        %554 = vmatprep.subr.bf16.mxu0 0
        %555 = vmatpush1.bf16.msra.mxu0 0
        %556 = vmatprep.subr.bf16.mxu0 0
        %557 = vmatpush1.bf16.msra.mxu0 0
        %558 = vmatprep.subr.bf16.mxu0 0
        %559 = vmatpush1.bf16.msra.mxu0 0
        %560 = vmatprep.subr.bf16.mxu0 0
        %561 = vmatpush1.bf16.msra.mxu0 0
        %562 = vmatprep.subr.bf16.mxu0 0
        %563 = vmatpush1.bf16.msra.mxu0 0
        %564 = vmatprep.subr.bf16.mxu0 0
        %565 = vmatpush1.bf16.msra.mxu0 %v548
        %566 = vmatprep.subr.bf16.mxu0 0
        %567 = vmatpush2.bf16.msra.mxu0 0
        %568 = vmatprep.subr.bf16.mxu0 0
        %569 = vmatpush2.bf16.msra.mxu0 0
        %570 = vmatprep.subr.bf16.mxu0 0
        %571 = vmatpush2.bf16.msra.mxu0 0
        %572 = vmatprep.subr.bf16.mxu0 0
        %573 = vmatpush2.bf16.msra.mxu0 0
        %574 = vmatprep.subr.bf16.mxu0 0
        %575 = vmatpush2.bf16.msra.mxu0 0
        %576 = vmatprep.subr.bf16.mxu0 0
        %577 = vmatpush2.bf16.msra.mxu0 0
        %578 = vmatprep.subr.bf16.mxu0 0
        %579 = vmatpush2.bf16.msra.mxu0 0
        %580 = vmatprep.subr.bf16.mxu0 0
        %581 = vmatpush2.bf16.msra.mxu0 0
        %582 = vmatprep.mubr.bf16.mxu0 0
        %583 = vmatmul.mubr.bf16.gmra.mxu0 %v538
        %v584 = vpop.f32.mrf.mxu0
        %v585 = vadd.f32 %v498, %v584
        %v586 = vpop.f32.mrf.mxu0
        %v587 = vpop.f32.mrf.mxu0
        %v588 = vadd.f32 %v503, %v587
        %v589 = vpop.f32.mrf.mxu0
        %590 = vmatprep.mubr.bf16.mxu0 0
        %591 = vmatmul.mubr.bf16.gmra.mxu0 %v541
        %v592 = vpop.f32.mrf.mxu0
        %v593 = vadd.f32 %v508, %v592
        %v594 = vpop.f32.mrf.mxu0
        %v595 = vpop.f32.mrf.mxu0
        %v596 = vadd.f32 %v513, %v595
        %v597 = vpop.f32.mrf.mxu0
        %598 = vdwg.mxu0
        %v599 = vmax.f32 %v585, 0.0
        %v600 = vmax.f32 %v588, 0.0
        %v601 = vmax.f32 %v593, 0.0
        %v602 = vmax.f32 %v596, 0.0
        %v603 = vld [vmem:[%s6] sm:$0xf]
        %v604 = vld [vmem:[%s6 + $0x4] sm:$0xf]
        %v605 = vld [vmem:[%s6 + $0x8] sm:$0xf]
        %v606 = vld [vmem:[%s6 + $0xc] sm:$0xf]
        %v607 = vpack.c.bf16 %v600, %v599
        %v608 = vpack.c.bf16 %v602, %v601
        %v609 = vld [vmem:[%s7] sm:$0xff]
        %v610 = vld [vmem:[%s7 + $0x8] sm:$0xff]
        %v611 = vld [vmem:[%s7 + $0x10] sm:$0xff]
        %v612 = vld [vmem:[%s7 + $0x18] sm:$0xff]
        %614 = vset.pattern.permute.xlu0 0
        %615 = vperm.xlu0 %614, %v609
        %v616 = vpop.permute.xlu0 %615
        %619 = vset.pattern.permute.xlu0 0
        %620 = vperm.xlu0 %619, %v610
        %v621 = vpop.permute.xlu0 %620
        %624 = vset.pattern.permute.xlu0 0
        %625 = vperm.xlu0 %624, %v611
        %v626 = vpop.permute.xlu0 %625
        %629 = vset.pattern.permute.xlu0 0
        %630 = vperm.xlu0 %629, %v612
        %v631 = vpop.permute.xlu0 %630
        %v637 = vunpack.c.l.b16 %v603
        %v638 = vunpack.c.l.b16 %v604
        %v639 = vunpack.c.l.b16 %v605
        %v640 = vunpack.c.l.b16 %v606
        %v641 = vpack.c.b16 %v638, %v637
        %v642 = vpack.c.b16 %v640, %v639
        %vm643 = vcmask 261120
        %v645 = vsel %vm643, %v641, 0
        %v648 = vsel %vm643, %v642, 0
        %650 = vmatprep.subr.bf16.mxu0 0
        %651 = vmatpush1.bf16.msra.mxu0 0
        %652 = vmatprep.subr.bf16.mxu0 0
        %653 = vmatpush1.bf16.msra.mxu0 0
        %654 = vmatprep.subr.bf16.mxu0 0
        %655 = vmatpush1.bf16.msra.mxu0 0
        %656 = vmatprep.subr.bf16.mxu0 0
        %657 = vmatpush1.bf16.msra.mxu0 0
        %658 = vmatprep.subr.bf16.mxu0 0
        %659 = vmatpush1.bf16.msra.mxu0 0
        %660 = vmatprep.subr.bf16.mxu0 0
        %661 = vmatpush1.bf16.msra.mxu0 0
        %662 = vmatprep.subr.bf16.mxu0 0
        %663 = vmatpush1.bf16.msra.mxu0 %v608
        %664 = vmatprep.subr.bf16.mxu0 0
        %665 = vmatpush1.bf16.msra.mxu0 %v607
        %666 = vmatprep.subr.bf16.mxu0 0
        %667 = vmatpush2.bf16.msra.mxu0 0
        %668 = vmatprep.subr.bf16.mxu0 0
        %669 = vmatpush2.bf16.msra.mxu0 0
        %670 = vmatprep.subr.bf16.mxu0 0
        %671 = vmatpush2.bf16.msra.mxu0 0
        %672 = vmatprep.subr.bf16.mxu0 0
        %673 = vmatpush2.bf16.msra.mxu0 0
        %674 = vmatprep.subr.bf16.mxu0 0
        %675 = vmatpush2.bf16.msra.mxu0 0
        %676 = vmatprep.subr.bf16.mxu0 0
        %677 = vmatpush2.bf16.msra.mxu0 0
        %678 = vmatprep.subr.bf16.mxu0 0
        %679 = vmatpush2.bf16.msra.mxu0 0
        %680 = vmatprep.subr.bf16.mxu0 0
        %681 = vmatpush2.bf16.msra.mxu0 0
        %682 = vmatprep.mubr.bf16.mxu0 0
        %683 = vmatmul.mubr.bf16.gmra.mxu0 %v645
        %v684 = vpop.f32.mrf.mxu0
        %v685 = vadd.f32 %v616, %v684
        %v686 = vpop.f32.mrf.mxu0
        %v687 = vpop.f32.mrf.mxu0
        %v688 = vadd.f32 %v621, %v687
        %v689 = vpop.f32.mrf.mxu0
        %690 = vmatprep.mubr.bf16.mxu0 0
        %691 = vmatmul.mubr.bf16.gmra.mxu0 %v648
        %v692 = vpop.f32.mrf.mxu0
        %v693 = vadd.f32 %v626, %v692
        %v694 = vpop.f32.mrf.mxu0
        %v695 = vpop.f32.mrf.mxu0
        %v696 = vadd.f32 %v631, %v695
        %v697 = vpop.f32.mrf.mxu0
        %698 = vdwg.mxu0
        %v699 = vmax.f32 %v685, 0.0
        %v700 = vmax.f32 %v688, 0.0
        %v701 = vmax.f32 %v693, 0.0
        %v702 = vmax.f32 %v696, 0.0
        %v703 = vld [vmem:[%s8] sm:$0x3]
        %v704 = vpack.c.bf16 %v700, %v699
        %v705 = vpack.c.bf16 %v702, %v701
        %v706 = vld [vmem:[%s9] sm:$0x7]
        %708 = vset.pattern.permute.xlu0 0
        %709 = vperm.xlu0 %708, %v706
        %v710 = vpop.permute.xlu0 %709
        %v713 = vsel %vm643, %v703, 0
        %715 = vmatprep.subr.bf16.mxu0 0
        %716 = vmatpush1.bf16.msra.mxu0 0
        %717 = vmatprep.subr.bf16.mxu0 0
        %718 = vmatpush1.bf16.msra.mxu0 0
        %719 = vmatprep.subr.bf16.mxu0 0
        %720 = vmatpush1.bf16.msra.mxu0 0
        %721 = vmatprep.subr.bf16.mxu0 0
        %722 = vmatpush1.bf16.msra.mxu0 0
        %723 = vmatprep.subr.bf16.mxu0 0
        %724 = vmatpush1.bf16.msra.mxu0 0
        %725 = vmatprep.subr.bf16.mxu0 0
        %726 = vmatpush1.bf16.msra.mxu0 0
        %727 = vmatprep.subr.bf16.mxu0 0
        %728 = vmatpush1.bf16.msra.mxu0 %v705
        %729 = vmatprep.subr.bf16.mxu0 0
        %730 = vmatpush1.bf16.msra.mxu0 %v704
        %731 = vmatprep.subr.bf16.mxu0 0
        %732 = vmatpush2.bf16.msra.mxu0 0
        %733 = vmatprep.subr.bf16.mxu0 0
        %734 = vmatpush2.bf16.msra.mxu0 0
        %735 = vmatprep.subr.bf16.mxu0 0
        %736 = vmatpush2.bf16.msra.mxu0 0
        %737 = vmatprep.subr.bf16.mxu0 0
        %738 = vmatpush2.bf16.msra.mxu0 0
        %739 = vmatprep.subr.bf16.mxu0 0
        %740 = vmatpush2.bf16.msra.mxu0 0
        %741 = vmatprep.subr.bf16.mxu0 0
        %742 = vmatpush2.bf16.msra.mxu0 0
        %743 = vmatprep.subr.bf16.mxu0 0
        %744 = vmatpush2.bf16.msra.mxu0 0
        %745 = vmatprep.subr.bf16.mxu0 0
        %746 = vmatpush2.bf16.msra.mxu0 0
        %747 = vmatprep.mubr.bf16.mxu0 0
        %748 = vmatmul.mubr.bf16.gmra.mxu0 %v713
        %v749 = vpop.f32.mrf.mxu0
        %v750 = vadd.f32 %v710, %v749
        %v751 = vpop.f32.mrf.mxu0
        %v752 = vpop.f32.mrf.mxu0
        %v753 = vpop.f32.mrf.mxu0
        %754 = vdwg.mxu0
        %v755 = vadd.f32 %v519, %v750
        %v756 = vld [vmem:[%s476] sm:$0x7]
        %v757 = vand.u32 2147483647, %v756
        %vm758 = vcmp.le.f32.partialorder %v757, 0.7853982
        %vm759 = vcmp.lt.s32.totalorder %v756, 0
        %v760 = vand.u32 %v756, 2139095040
        %v761 = vshrl.u32 %v760, 23
        %v762 = vsub.s32 %v761, 127
        %v763 = vand.u32 2147483647, %v756
        %v764 = vand.u32 %v763, 8388607
        %v765 = vor.u32 %v764, 8388608
        %v766 = vsub.s32 0, %v765
        %v767 = vadd.s32 %v762, 1
        %vm768 = vcmp.gt.s32.totalorder %v767, 0
        %v769 = vsel %vm768, %v767, 0
        %v770 = vshrl.u32 %v769, 5
        %v771 = vand.u32 %v769, 31
        %v772 = vsub.s32 32, %v771
        %v773 = vshrl.u32 683565275, %v772
        %v774 = vshll.u32 683565275, %v771
        %v775 = vshrl.u32 2475754826, %v772
        %v776 = vor.u32 %v774, %v775
        %v777 = vshll.u32 2475754826, %v771
        %v778 = vshrl.u32 2131351028, %v772
        %v779 = vor.u32 %v777, %v778
        %v780 = vshll.u32 2131351028, %v771
        %v781 = vshrl.u32 2102212464, %v772
        %v782 = vor.u32 %v780, %v781
        %v783 = vshll.u32 2102212464, %v771
        %v784 = vshrl.u32 920167782, %v772
        %v785 = vor.u32 %v783, %v784
        %v786 = vshll.u32 920167782, %v771
        %v787 = vshrl.u32 1326507024, %v772
        %v788 = vor.u32 %v786, %v787
        %vm789 = vcmp.lt.s32.totalorder %v770, 1
        %vm790 = vcmp.lt.s32.totalorder %v770, 2
        %vm791 = vcmp.lt.s32.totalorder %v770, 3
        %vm792 = vcmp.lt.s32.totalorder %v770, 4
        %v793 = vsel %vm789, %v773, %v776
        %v794 = vsel %vm792, %v782, 2102212464
        %v795 = vsel %vm791, %v779, %v794
        %v796 = vsel %vm790, %v793, %v795
        %v797 = vsel %vm789, %v776, %v779
        %v798 = vsel %vm792, %v785, 920167782
        %v799 = vsel %vm791, %v782, %v798
        %v800 = vsel %vm790, %v797, %v799
        %v801 = vsel %vm789, %v779, %v782
        %v802 = vsel %vm792, %v788, 1326507024
        %v803 = vsel %vm791, %v785, %v802
        %v804 = vsel %vm790, %v801, %v803
        %v805 = vshll.u32 %v765, 8
        %v806 = vmul.u32.u64.compose %v805, %v804
        %v807 = vextract.low.u32 %v806
        %v808 = vextract.high.u32 %v806
        %v809 = vmul.u32.u64.compose %v805, %v800
        %v810 = vextract.low.u32 %v809
        %v811 = vextract.high.u32 %v809
        %v812 = vmul.u32 %v805, %v796
        %v813 = vadd.s32 %v808, %v810
        %vm814 = vc.u32 %v808, %v810
        %v815 = vadd.s32 %v811, 1
        %v816 = vsel %vm814, %v815, %v811
        %v817 = vadd.s32 %v812, %v816
        %v818 = vadd.s32 %v817, 536870912
        %v819 = vshrl.u32 %v818, 30
        %v820 = vshll.u32 %v819, 30
        %v821 = vsub.s32 %v817, %v820
        %vm822 = vcmp.lt.s32.totalorder %v821, 0
        %v823 = vsub.s32 0, %v821
        %v824 = vsel %vm822, %v823, %v821
        %v825 = vclz %v824
        %v826 = vsub.s32 %v825, 2
        %vm827 = vcmp.gt.s32.totalorder 0, %v826
        %v828 = vsel %vm827, 0, %v826
        %v829 = vsub.s32 32, %v828
        %v830 = vshll.u32 %v821, %v828
        %v831 = vshrl.u32 %v813, %v829
        %v832 = vor.u32 %v830, %v831
        %v833 = vsub.s32 4294967266, %v828
        %v834 = vadd.s32 %v833, 127
        %v835 = vshll.u32 %v834, 23
        %v836 = vor.u32 4788187, %v835
        %v837 = vand.u32 2147483647, %v836
        %v839 = vcvt.s32.f32 %v832
        %v840 = vmul.f32 %v839, %v837
        %v841 = vxor.u32 %v840, 2147483648
        %v842 = vsel %vm759, %v841, %v840
        %v843 = vsub.s32 4, %v819
        %v844 = vsel %vm759, %v843, %v819
        %v845 = vsel %vm758, %v756, %v842
        %v846 = vsel %vm758, 0, %v844
        %v847 = vcosq.f32.pop %v845
        %v848 = vsinq.f32.pop %v845
        %vm849 = vweird.f32 %v756
        %v850 = vadd.s32 %v846, 3
        %v851 = vand.u32 %v850, 3
        %vm852 = vcmp.lt.s32.totalorder %v851, 2
        %vm853 = vcmp.eq.s32.totalorder %v851, 0
        %v854 = vxor.u32 %v848, 2147483648
        %v855 = vsel %vm853, %v847, %v854
        %vm856 = vcmp.eq.s32.totalorder %v851, 2
        %v857 = vxor.u32 %v847, 2147483648
        %v858 = vsel %vm856, %v857, %v848
        %v859 = vsel %vm852, %v855, %v858
        %v860 = vsel %vm849, nan, %v859
        %v861 = vand.u32 2147483647, %v756
        %vm862 = vcmp.le.f32.partialorder %v861, 0.7853982
        %vm863 = vcmp.lt.s32.totalorder %v756, 0
        %v864 = vand.u32 %v756, 2139095040
        %v865 = vshrl.u32 %v864, 23
        %v866 = vsub.s32 %v865, 127
        %v867 = vand.u32 2147483647, %v756
        %v868 = vand.u32 %v867, 8388607
        %v869 = vor.u32 %v868, 8388608
        %v870 = vsub.s32 0, %v869
        %v871 = vadd.s32 %v866, 1
        %vm872 = vcmp.gt.s32.totalorder %v871, 0
        %v873 = vsel %vm872, %v871, 0
        %v874 = vshrl.u32 %v873, 5
        %v875 = vand.u32 %v873, 31
        %v876 = vsub.s32 32, %v875
        %v877 = vshrl.u32 683565275, %v876
        %v878 = vshll.u32 683565275, %v875
        %v879 = vshrl.u32 2475754826, %v876
        %v880 = vor.u32 %v878, %v879
        %v881 = vshll.u32 2475754826, %v875
        %v882 = vshrl.u32 2131351028, %v876
        %v883 = vor.u32 %v881, %v882
        %v884 = vshll.u32 2131351028, %v875
        %v885 = vshrl.u32 2102212464, %v876
        %v886 = vor.u32 %v884, %v885
        %v887 = vshll.u32 2102212464, %v875
        %v888 = vshrl.u32 920167782, %v876
        %v889 = vor.u32 %v887, %v888
        %v890 = vshll.u32 920167782, %v875
        %v891 = vshrl.u32 1326507024, %v876
        %v892 = vor.u32 %v890, %v891
        %vm893 = vcmp.lt.s32.totalorder %v874, 1
        %vm894 = vcmp.lt.s32.totalorder %v874, 2
        %vm895 = vcmp.lt.s32.totalorder %v874, 3
        %vm896 = vcmp.lt.s32.totalorder %v874, 4
        %v897 = vsel %vm893, %v877, %v880
        %v898 = vsel %vm896, %v886, 2102212464
        %v899 = vsel %vm895, %v883, %v898
        %v900 = vsel %vm894, %v897, %v899
        %v901 = vsel %vm893, %v880, %v883
        %v902 = vsel %vm896, %v889, 920167782
        %v903 = vsel %vm895, %v886, %v902
        %v904 = vsel %vm894, %v901, %v903
        %v905 = vsel %vm893, %v883, %v886
        %v906 = vsel %vm896, %v892, 1326507024
        %v907 = vsel %vm895, %v889, %v906
        %v908 = vsel %vm894, %v905, %v907
        %v909 = vshll.u32 %v869, 8
        %v910 = vmul.u32.u64.compose %v909, %v908
        %v911 = vextract.low.u32 %v910
        %v912 = vextract.high.u32 %v910
        %v913 = vmul.u32.u64.compose %v909, %v904
        %v914 = vextract.low.u32 %v913
        %v915 = vextract.high.u32 %v913
        %v916 = vmul.u32 %v909, %v900
        %v917 = vadd.s32 %v912, %v914
        %vm918 = vc.u32 %v912, %v914
        %v919 = vadd.s32 %v915, 1
        %v920 = vsel %vm918, %v919, %v915
        %v921 = vadd.s32 %v916, %v920
        %v922 = vadd.s32 %v921, 536870912
        %v923 = vshrl.u32 %v922, 30
        %v924 = vshll.u32 %v923, 30
        %v925 = vsub.s32 %v921, %v924
        %vm926 = vcmp.lt.s32.totalorder %v925, 0
        %v927 = vsub.s32 0, %v925
        %v928 = vsel %vm926, %v927, %v925
        %v929 = vclz %v928
        %v930 = vsub.s32 %v929, 2
        %vm931 = vcmp.gt.s32.totalorder 0, %v930
        %v932 = vsel %vm931, 0, %v930
        %v933 = vsub.s32 32, %v932
        %v934 = vshll.u32 %v925, %v932
        %v935 = vshrl.u32 %v917, %v933
        %v936 = vor.u32 %v934, %v935
        %v937 = vsub.s32 4294967266, %v932
        %v938 = vadd.s32 %v937, 127
        %v939 = vshll.u32 %v938, 23
        %v940 = vor.u32 4788187, %v939
        %v941 = vand.u32 2147483647, %v940
        %v943 = vcvt.s32.f32 %v936
        %v944 = vmul.f32 %v943, %v941
        %v945 = vxor.u32 %v944, 2147483648
        %v946 = vsel %vm863, %v945, %v944
        %v947 = vsub.s32 4, %v923
        %v948 = vsel %vm863, %v947, %v923
        %v949 = vsel %vm862, %v756, %v946
        %v950 = vsel %vm862, 0, %v948
        %v951 = vcosq.f32.pop %v949
        %v952 = vsinq.f32.pop %v949
        %vm953 = vweird.f32 %v756
        %v954 = vand.u32 %v950, 3
        %vm955 = vcmp.lt.s32.totalorder %v954, 2
        %vm956 = vcmp.eq.s32.totalorder %v954, 0
        %v957 = vxor.u32 %v952, 2147483648
        %v958 = vsel %vm956, %v951, %v957
        %vm959 = vcmp.eq.s32.totalorder %v954, 2
        %v960 = vxor.u32 %v951, 2147483648
        %v961 = vsel %vm959, %v960, %v952
        %v962 = vsel %vm955, %v958, %v961
        %v963 = vsel %vm953, nan, %v962
        %v965 = vrot.slane %v860, 2
        %v967 = vmul.f32 %v755, %v965
        %v968 = vadd.f32 %v756, %v967
        %v970 = vrot.slane %v963, 1
        %v972 = vmul.f32 %v755, %v970
        %v974 = vrot.slane %v972, 1
        %v976 = vadd.f32 %v968, %v974
        %v977 = vrot.slane %v963, 2
        %v979 = vmul.f32 %v755, %v977
        %v981 = vrot.slane %v979, 7
        %v983 = vsub.f32 %v756, %v981
        %v984 = vrot.slane %v860, 1
        %v986 = vmul.f32 %v755, %v984
        %v987 = vadd.f32 %v983, %v986
        %v988 = vadd.f32 %v756, %v755
        %v989 = vadd.f32 %v988, 3.1415927
        %v990 = vmul.f32 %v989, 0.15915494
        %v991 = vfloor.f32 %v990
        %v992 = vmul.f32 %v991, 6.2831855
        %v993 = vsub.f32 %v988, %v992
        %v994 = vsel %vm543, %v976, %v987
        %v995 = vsel %vm544, %v994, %v993
        %996 = vst [vmem:[%s462] sm:$0x7] %v995
        %v997 = vld [vmem:[%s480] sm:$0x7]
        %v998 = vsub.f32 %v995, %v997
        %v999 = vlaneseq
        %v1000 = vshrl.u32 %v999, 7
        %vm1001 = vcmp.eq.s32.totalorder %v1000, 2
        %v1002 = vadd.f32 %v998, 3.1415927
        %v1003 = vmul.f32 %v1002, 0.15915494
        %v1004 = vfloor.f32 %v1003
        %v1005 = vmul.f32 %v1004, 6.2831855
        %v1006 = vsub.f32 %v998, %v1005
        %v1007 = vsel %vm1001, %v1006, %v998
        %v1008 = vld [vmem:[%s10] sm:$0x7]
        %1010 = vset.pattern.permute.xlu0 0
        %1011 = vperm.xlu0 %1010, %v1008
        %v1012 = vpop.permute.xlu0 %1011
        %v1014 = vmul.f32 %v1007, %v1012
        %v1015 = vmul.f32 %v1014, %v1014
        %vm1016 = vcmask 1042432
        %v1017 = vsel %vm1016, %v1015, 0.0
        %v1018 = vrot.slane %v1017, 4
        %v1019 = vadd.f32 %v1017, %v1018
        %v1020 = vrot.slane %v1019, 2
        %v1021 = vadd.f32 %v1019, %v1020
        %v1022 = vrot.slane %v1021, 1
        %v1023 = vadd.f32 %v1021, %v1022
        %v1024 = vmul.f32 %v1023, -5000.0
        %v1025 = vmul.f32 %v1024, 1.442695
        %v1026 = vpow.pop %v1025
        %v1027 = vmul.f32 %v1026, 0.62334734
        %v1028 = vlaneseq
        %v1029 = vand.u32 %v1028, 127
        %vm1030 = vcmp.lt.s32.totalorder %v1029, 64
        %v1031 = vsel %vm1030, 1, 0
        %v1032 = vcvt.s32.f32 %v1031
        %v1033 = vmul.f32 %v1027, %v1032
        %1034 = vst [vmem:[%s468] sm:$0x1] %v1033
        %s1035 = sand.u32 %s294, 1
        %s1036 = scalar_lea.sflag [#allocation3], %s1035
        %s1037 = sand.u32 %s294, 1
        %s1038 = smul.addr %s1037, 4
        %s1039 = scalar_lea.vmem [#allocation2], %s1038
        %s1040 = sand.u32 %s320, 1
        %s1041 = scalar_lea.sflag [#allocation5], %s1040
        %s1042 = sand.u32 %s320, 1
        %s1043 = scalar_lea.vmem [#allocation4], %s1042
        // Predicated region
        $region65: #{tpu_custom_call.1} parent=63 // pred_check
          %p1044 = pneg %p304
        $region66: #{tpu_custom_call.1} parent=63 // pred_check_branch
          %1046 = sbr.rel (%p1044) target = $region68
        $region67: #{tpu_custom_call.1} parent=63 // pred_region
          %s1048 = ssub.s32 64, 64
          %1049 = vsyncadd %s1036, %s1048
          %s1050 = smul.addr %s30, 64
          %s1051 = scalar_lea.hbm %s11, %s1050
          %s1053 = sshll.u32 %s1039, 4
          %s1054 = int_to_ptr.vmem [resolvable:$true] %s1053
          %1056 = dma.vmem_to_hbm [thread:$0]  %s1054, 64, %s1051, %s1036
        $region68: #{tpu_custom_call.1} parent=63 // pred_fallthru
          _
        // Predicated region
        $region69: #{tpu_custom_call.1} parent=63 // pred_check
          %p1057 = pneg %p330
        $region70: #{tpu_custom_call.1} parent=63 // pred_check_branch
          %1059 = sbr.rel (%p1057) target = $region72
        $region71: #{tpu_custom_call.1} parent=63 // pred_region
          %s1061 = ssub.s32 16, 16
          %1062 = vsyncadd %s1041, %s1061
          %s1063 = smul.addr %s30, 16
          %s1064 = scalar_lea.hbm %s12, %s1063
          %s1066 = sshll.u32 %s1043, 4
          %s1067 = int_to_ptr.vmem [resolvable:$true] %s1066
          %1069 = dma.vmem_to_hbm [thread:$0]  %s1067, 16, %s1064, %s1041
        $region72: #{tpu_custom_call.1} parent=63 // pred_fallthru
          _
      $region64: #{tpu_custom_call.1} parent=5 // pred_fallthru
        _
      %p1070 = scmp.le.s32.totalorder 2, %s25
      // Predicated region
      $region73: #{tpu_custom_call.1} parent=5 // pred_check
        %p1071 = pneg %p1070
      $region74: #{tpu_custom_call.1} parent=5 // pred_check_branch
        %1073 = sbr.rel (%p1071) target = $region76
      $region75: #{tpu_custom_call.1} parent=5 // pred_region
        %s1074 = ssub.s32 %s25, 2
        // Predicated region
        $region77: #{tpu_custom_call.1} parent=75 // pred_check
          %p1075 = pneg %p310
        $region78: #{tpu_custom_call.1} parent=75 // pred_check_branch
          %1077 = sbr.rel (%p1075) target = $region80
        $region79: #{tpu_custom_call.1} parent=75 // pred_region
          %s1078 = sand.u32 %s295, 1
          %s1079 = scalar_lea.sflag [#allocation3], %s1078
          %s1080 = sand.u32 %s295, 1
          %s1081 = smul.addr %s1080, 4
          %s1082 = scalar_lea.vmem [#allocation2], %s1081
          %1083 = dma.done %s1079, 64
        $region80: #{tpu_custom_call.1} parent=75 // pred_fallthru
          _
        // Predicated region
        $region81: #{tpu_custom_call.1} parent=75 // pred_check
          %p1084 = pneg %p336
        $region82: #{tpu_custom_call.1} parent=75 // pred_check_branch
          %1086 = sbr.rel (%p1084) target = $region84
        $region83: #{tpu_custom_call.1} parent=75 // pred_region
          %s1087 = sand.u32 %s321, 1
          %s1088 = scalar_lea.sflag [#allocation5], %s1087
          %s1089 = sand.u32 %s321, 1
          %s1090 = scalar_lea.vmem [#allocation4], %s1089
          %1091 = dma.done %s1088, 16
        $region84: #{tpu_custom_call.1} parent=75 // pred_fallthru
          _
      $region76: #{tpu_custom_call.1} parent=5 // pred_fallthru
        _
    $region6: #{tpu_custom_call.1} parent=1 // loop_footer
      %s29 = sadd.s32 1, %s25
    $region7: #{tpu_custom_call.1} parent=1 // loop_footer_branch
      %24 = sbr.rel target = $region3
    $region8: #{tpu_custom_call.1} parent=1 // loop_exit
      _
    %1092 = vsyncpa [#allocation3], 1
    %s1093 = scalar_lea.sflag [#allocation3], 1
    %1094 = vsyncpa %s1093, 1
    %1095 = vsyncpa [#allocation5], 1
    %s1096 = scalar_lea.sflag [#allocation5], 1
    %1097 = vsyncpa %s1096, 1

</llo_original>
